<compile_context>
chip_gen: v7x
topology: tpu7x:2x2x1
jax: 0.10.0
libtpu: 0.0.40
codegen_flags: <defaults>
</compile_context>

<pallas_src>
import numpy as np
import jax
import jax.numpy as jnp
from jax.experimental import pallas as pl
from jax.experimental.pallas import tpu as pltpu

LN_EPS = 1e-5


def _round_up(x, m):
    return ((x + m - 1) // m) * m


def _layer_norm(x, eps=LN_EPS):
    # Parameter-free layer norm over the last (lane) axis, f32 math.
    mu = jnp.mean(x, axis=-1, keepdims=True)
    var = jnp.mean((x - mu) ** 2, axis=-1, keepdims=True)
    return (x - mu) * jax.lax.rsqrt(var + eps)


def _encoder_block(h, w_bf16, b_f32):
    # h: (rt, D) f32 ; w: (D, D) bf16 ; b: (1, D) f32
    z = jnp.dot(h.astype(jnp.bfloat16), w_bf16, preferred_element_type=jnp.float32)
    z = z + b_f32
    # TODO(synk): PyTorch nn.GELU defaults to the exact erf form; tanh approx
    # is used here for the EUP-friendly path (differences ~1e-3 per layer).
    z = jax.nn.gelu(z, approximate=True)
    return _layer_norm(z + h)


# ---------------------------------------------------------------------------
# Fused kernel: student encoder (L layers) + regression head
#             + teacher encoder (L layers) + Data2Vec target construction.
#   grid = (masked_row_tiles, L); activations resident in VMEM scratch;
#   weight/bias stacks fully VMEM-resident (constant index_map) and indexed
#   per layer inside the kernel.
# ---------------------------------------------------------------------------
def _make_fused_kernel(top_k):
    def _kernel(sx_ref, tx_ref, sw_ref, sb_ref, tw_ref, tb_ref, hw_ref, hb_ref,
                pred_ref, targ_ref, hs_ref, ht_ref, acc_ref):
        layer = pl.program_id(1)
        n_layers = pl.num_programs(1)

        @pl.when(layer == 0)
        def _():
            hs_ref[...] = sx_ref[...].astype(jnp.float32)
            ht_ref[...] = tx_ref[...].astype(jnp.float32)
            acc_ref[...] = jnp.zeros_like(acc_ref)

        # Resident weight stacks: dynamic first-axis index -> (D, D) / (1, D).
        hs_new = _encoder_block(hs_ref[...], sw_ref[layer], sb_ref[layer])
        ht_new = _encoder_block(ht_ref[...], tw_ref[layer], tb_ref[layer])
        hs_ref[...] = hs_new
        ht_ref[...] = ht_new

        @pl.when(layer >= n_layers - top_k)
        def _():
            # Teacher hidden states are already LayerNorm outputs of the block,
            # so the spec's per-layer F.layer_norm is identity up to eps and is
            # dropped; accumulate the hidden state directly.
            acc_ref[...] = acc_ref[...] + ht_new

        @pl.when(layer == n_layers - 1)
        def _():
            # Regression head (per-token Linear): head(x)[mask] == head(x[mask]).
            head = jnp.dot(hs_new.astype(jnp.bfloat16), hw_ref[...],
                           preferred_element_type=jnp.float32) + hb_ref[...]
            pred_ref[...] = head.astype(pred_ref.dtype)
            # normalize_targets=True (vision/text branch).  The /top_k before
            # the final LayerNorm is dropped: LN is scale-invariant.
            targ_ref[...] = _layer_norm(acc_ref[...]).astype(targ_ref.dtype)

    return _kernel


def _fused_forward(sx, tx, sw, sb, tw, tb, hw, hb, *, top_k, row_tile):
    m_pad, d = sx.shape
    num_layers = sw.shape[0]
    assert m_pad % row_tile == 0 and row_tile % 8 == 0
    grid = (m_pad // row_tile, num_layers)
    return pl.pallas_call(
        _make_fused_kernel(top_k),
        out_shape=(jax.ShapeDtypeStruct((m_pad, d), jnp.float32),
                   jax.ShapeDtypeStruct((m_pad, d), jnp.float32)),
        grid_spec=pltpu.PrefetchScalarGridSpec(
            num_scalar_prefetch=0,
            grid=grid,
            in_specs=[
                pl.BlockSpec((row_tile, d), lambda i, l: (i, 0)),            # student rows
                pl.BlockSpec((row_tile, d), lambda i, l: (i, 0)),            # teacher rows
                pl.BlockSpec((num_layers, d, d), lambda i, l: (0, 0, 0)),    # student W stack (resident)
                pl.BlockSpec((num_layers, 1, d), lambda i, l: (0, 0, 0)),    # student b stack (resident)
                pl.BlockSpec((num_layers, d, d), lambda i, l: (0, 0, 0)),    # teacher W stack (resident)
                pl.BlockSpec((num_layers, 1, d), lambda i, l: (0, 0, 0)),    # teacher b stack (resident)
                pl.BlockSpec((d, d), lambda i, l: (0, 0)),                   # head W (resident)
                pl.BlockSpec((1, d), lambda i, l: (0, 0)),                   # head b (resident)
            ],
            out_specs=(
                pl.BlockSpec((row_tile, d), lambda i, l: (i, 0)),            # prediction (masked rows)
                pl.BlockSpec((row_tile, d), lambda i, l: (i, 0)),            # target (masked rows)
            ),
            scratch_shapes=[
                pltpu.VMEM((row_tile, d), jnp.float32),   # resident student activation
                pltpu.VMEM((row_tile, d), jnp.float32),   # resident teacher activation
                pltpu.VMEM((row_tile, d), jnp.float32),   # top-k accumulator
            ],
        ),
        compiler_params=pltpu.CompilerParams(
            dimension_semantics=("parallel", "arbitrary"),
            vmem_limit_bytes=48 * 1024 * 1024,   # fits v7x 64 MiB/TC with headroom
        ),
    )(sx, tx, sw, sb, tw, tb, hw, hb)


# ---------------------------------------------------------------------------
# Data2Vec forward (modality='vision', normalize_targets=True)
# ---------------------------------------------------------------------------
def data2vec_forward(student_input, lengths, teacher_input, mask, params, *, row_tile=256):
    del lengths  # synthetic encoder has no variable-length handling
    b, t, d = student_input.shape
    n = b * t
    s_flat = student_input.reshape(n, d)
    t_flat = teacher_input.reshape(n, d)

    # Masked selection is fused out of the hot path: gather the masked rows
    # ONCE on the input side (mask is concrete at trace time -> static gather),
    # run both encoders only on those rows, and never materialize full [N, D]
    # activations in HBM.  This is exact because the synthetic encoder is
    # per-token.
    # TODO(synk): a real transformer encoder (cross-token attention) or a
    # traced/dynamic mask would need the full sequence + an in-kernel row
    # gather via PrefetchScalarGridSpec instead of this host-side gather.
    mask_flat = np.asarray(mask).reshape(-1)
    idx = np.nonzero(mask_flat)[0].astype(np.int32)
    m = int(idx.shape[0])

    rt = min(row_tile, _round_up(max(m, 1), 8))
    m_pad = _round_up(max(m, 1), rt)
    if m_pad > m:
        idx = np.concatenate([idx, np.zeros(m_pad - m, dtype=np.int32)])
    idx_dev = jnp.asarray(idx)

    s_masked = jnp.take(s_flat, idx_dev, axis=0)
    t_masked = jnp.take(t_flat, idx_dev, axis=0)

    pred_pad, targ_pad = _fused_forward(
        s_masked, t_masked,
        params["student_w"], params["student_b"],
        params["teacher_w"], params["teacher_b"],
        params["head_w"], params["head_b"],
        top_k=params["average_top_k_layers"],
        row_tile=rt)

    return pred_pad[:m], targ_pad[:m]


# ---------------------------------------------------------------------------
# Deterministic parameter construction (weights stacked per layer)
# ---------------------------------------------------------------------------
def init_params(key, embed_dim, num_layers, average_top_k_layers):
    kw, kb, khw, khb = jax.random.split(key, 4)
    w_stack = (0.05 * jax.random.normal(
        kw, (num_layers, embed_dim, embed_dim), jnp.float32)).astype(jnp.bfloat16)
    b_stack = 0.01 * jax.random.normal(
        kb, (num_layers, 1, embed_dim), jnp.float32)
    head_w = (0.05 * jax.random.normal(
        khw, (embed_dim, embed_dim), jnp.float32)).astype(jnp.bfloat16)
    head_b = 0.01 * jax.random.normal(khb, (1, embed_dim), jnp.float32)
    return {
        "student_w": w_stack,
        "student_b": b_stack,
        # EMA teacher is an exact copy at decay-step 0 (ema_step is an
        # optimizer-time op, not part of the forward pass).
        "teacher_w": w_stack,
        "teacher_b": b_stack,
        "head_w": head_w,
        "head_b": head_b,
        "average_top_k_layers": average_top_k_layers,
    }


if __name__ == "__main__":
    B, T, D = 2, 8, 128          # D lane-dense (multiple of 128); N = 16 rows
    NUM_LAYERS = 4
    TOP_K = 3

    key = jax.random.PRNGKey(0)
    k_in, k_teach, k_par = jax.random.split(key, 3)

    student_input = jax.random.normal(k_in, (B, T, D), jnp.float32)
    teacher_input = student_input + 0.01 * jax.random.normal(k_teach, (B, T, D), jnp.float32)
    lengths = jnp.full((B,), T, dtype=jnp.int32)
    # deterministic mask: every other token masked -> M = B*T//2 = 8 (sublane-aligned)
    mask = (np.arange(B * T) % 2 == 0).reshape(B, T)

    params = init_params(k_par, D, NUM_LAYERS, TOP_K)

    prediction, target = data2vec_forward(
        student_input, lengths, teacher_input, mask, params)
    prediction = jax.block_until_ready(prediction)
    target = jax.block_until_ready(target)

    m = int(mask.sum())
    assert prediction.shape == (m, D), prediction.shape
    assert target.shape == (m, D), target.shape
    assert bool(jnp.all(jnp.isfinite(prediction))) and bool(jnp.all(jnp.isfinite(target)))
    print("KERNEL_OK")
</pallas_src>

<mosaic_0001>
module attributes {stable_mosaic.version = 11 : i64} {
  func.func @_kernel(%arg0: i32, %arg1: i32, %arg2: memref<8x128xf32, #tpu.memory_space<vmem>>, %arg3: memref<8x128xf32, #tpu.memory_space<vmem>>, %arg4: memref<4x128x128xbf16, #tpu.memory_space<vmem>>, %arg5: memref<4x1x128xf32, #tpu.memory_space<vmem>>, %arg6: memref<4x128x128xbf16, #tpu.memory_space<vmem>>, %arg7: memref<4x1x128xf32, #tpu.memory_space<vmem>>, %arg8: memref<128x128xbf16, #tpu.memory_space<vmem>>, %arg9: memref<1x128xf32, #tpu.memory_space<vmem>>, %arg10: memref<8x128xf32, #tpu.memory_space<vmem>>, %arg11: memref<8x128xf32, #tpu.memory_space<vmem>>, %arg12: memref<8x128xf32, #tpu.memory_space<vmem>>, %arg13: memref<8x128xf32, #tpu.memory_space<vmem>>, %arg14: memref<8x128xf32, #tpu.memory_space<vmem>>) attributes {dimension_semantics = [#tpu.dimension_semantics<parallel>, #tpu.dimension_semantics<arbitrary>], iteration_bounds = array<i64: 1, 4>, scalar_prefetch = 0 : i64, scratch_operands = 3 : i64, tpu.core_type = #tpu.core_type<tc>, window_params = [{transform_indices = @transform_0, window_bounds = array<i64: 8, 128>}, {transform_indices = @transform_1, window_bounds = array<i64: 8, 128>}, {pipeline_mode = #tpu.pipeline_mode<synchronous>, transform_indices = @transform_2, window_bounds = array<i64: 4, 128, 128>}, {pipeline_mode = #tpu.pipeline_mode<synchronous>, transform_indices = @transform_3, window_bounds = array<i64: 4, 1, 128>}, {pipeline_mode = #tpu.pipeline_mode<synchronous>, transform_indices = @transform_4, window_bounds = array<i64: 4, 128, 128>}, {pipeline_mode = #tpu.pipeline_mode<synchronous>, transform_indices = @transform_5, window_bounds = array<i64: 4, 1, 128>}, {pipeline_mode = #tpu.pipeline_mode<synchronous>, transform_indices = @transform_6, window_bounds = array<i64: 128, 128>}, {pipeline_mode = #tpu.pipeline_mode<synchronous>, transform_indices = @transform_7, window_bounds = array<i64: 1, 128>}, {transform_indices = @transform_8, window_bounds = array<i64: 8, 128>}, {transform_indices = @transform_9, window_bounds = array<i64: 8, 128>}]} {
    %c0_i32 = arith.constant 0 : i32
    %0 = arith.cmpi eq, %arg1, %c0_i32 : i32
    %1 = arith.extui %0 : i1 to i32
    %c0_i32_0 = arith.constant 0 : i32
    %2 = arith.cmpi ne, %1, %c0_i32_0 : i32
    scf.if %2 {
      %c0_37 = arith.constant 0 : index
      %c0_38 = arith.constant 0 : index
      %97 = vector.load %arg2[%c0_37, %c0_38] : memref<8x128xf32, #tpu.memory_space<vmem>>, vector<8x128xf32>
      %c0_39 = arith.constant 0 : index
      %c0_40 = arith.constant 0 : index
      %98 = vector.load %arg12[%c0_39, %c0_40] : memref<8x128xf32, #tpu.memory_space<vmem>>, vector<8x128xf32>
      tpu.vector_store %arg12[%c0_39, %c0_40], %97 {strides = array<i32>} : memref<8x128xf32, #tpu.memory_space<vmem>>, vector<8x128xf32>,
      %c0_41 = arith.constant 0 : index
      %c0_42 = arith.constant 0 : index
      %99 = vector.load %arg3[%c0_41, %c0_42] : memref<8x128xf32, #tpu.memory_space<vmem>>, vector<8x128xf32>
      %c0_43 = arith.constant 0 : index
      %c0_44 = arith.constant 0 : index
      %100 = vector.load %arg13[%c0_43, %c0_44] : memref<8x128xf32, #tpu.memory_space<vmem>>, vector<8x128xf32>
      tpu.vector_store %arg13[%c0_43, %c0_44], %99 {strides = array<i32>} : memref<8x128xf32, #tpu.memory_space<vmem>>, vector<8x128xf32>,
      %cst_45 = arith.constant 0.000000e+00 : f32
      %101 = vector.broadcast %cst_45 : f32 to vector<8x128xf32>
      %c0_46 = arith.constant 0 : index
      %c0_47 = arith.constant 0 : index
      %102 = vector.load %arg14[%c0_46, %c0_47] : memref<8x128xf32, #tpu.memory_space<vmem>>, vector<8x128xf32>
      tpu.vector_store %arg14[%c0_46, %c0_47], %101 {strides = array<i32>} : memref<8x128xf32, #tpu.memory_space<vmem>>, vector<8x128xf32>,
    } else {
    }
    %c0 = arith.constant 0 : index
    %c0_1 = arith.constant 0 : index
    %3 = vector.load %arg12[%c0, %c0_1] : memref<8x128xf32, #tpu.memory_space<vmem>>, vector<8x128xf32>
    %4 = arith.index_cast %arg1 : i32 to index
    %c0_2 = arith.constant 0 : index
    %c0_3 = arith.constant 0 : index
    %5 = vector.load %arg4[%4, %c0_2, %c0_3] : memref<4x128x128xbf16, #tpu.memory_space<vmem>>, vector<1x128x128xbf16>
    %6 = vector.shape_cast %5 : vector<1x128x128xbf16> to vector<128x128xbf16>
    %7 = arith.index_cast %arg1 : i32 to index
    %c0_4 = arith.constant 0 : index
    %c0_5 = arith.constant 0 : index
    %8 = vector.load %arg5[%7, %c0_4, %c0_5] : memref<4x1x128xf32, #tpu.memory_space<vmem>>, vector<1x1x128xf32>
    %9 = vector.shape_cast %8 : vector<1x1x128xf32> to vector<1x128xf32>
    %10 = arith.truncf %3 : vector<8x128xf32> to vector<8x128xbf16>
    %cst = arith.constant dense<0.000000e+00> : vector<8x128xf32>
    %11 = tpu.matmul %10, %6, %cst {dimension_numbers = #tpu.dot_dimension_numbers<[1], [0], [0], [1], [0, 0, 1, 1], [], []>} : vector<8x128xbf16>, vector<128x128xbf16>, vector<8x128xf32> -> vector<8x128xf32>
    %12 = vector.broadcast %9 : vector<1x128xf32> to vector<8x128xf32>
    %13 = arith.addf %11, %12 : vector<8x128xf32>
    %14 = arith.mulf %13, %13 : vector<8x128xf32>
    %15 = arith.mulf %13, %14 : vector<8x128xf32>
    %cst_6 = arith.constant 4.471500e-02 : f32
    %16 = vector.broadcast %cst_6 : f32 to vector<8x128xf32>
    %17 = arith.mulf %16, %15 : vector<8x128xf32>
    %18 = arith.addf %13, %17 : vector<8x128xf32>
    %cst_7 = arith.constant 0.797884583 : f32
    %19 = vector.broadcast %cst_7 : f32 to vector<8x128xf32>
    %20 = arith.mulf %19, %18 : vector<8x128xf32>
    %21 = math.tanh %20 : vector<8x128xf32>
    %cst_8 = arith.constant 1.000000e+00 : f32
    %22 = vector.broadcast %cst_8 : f32 to vector<8x128xf32>
    %23 = arith.addf %22, %21 : vector<8x128xf32>
    %cst_9 = arith.constant 5.000000e-01 : f32
    %24 = vector.broadcast %cst_9 : f32 to vector<8x128xf32>
    %25 = arith.mulf %24, %23 : vector<8x128xf32>
    %26 = arith.mulf %13, %25 : vector<8x128xf32>
    %27 = arith.addf %26, %3 : vector<8x128xf32>
    %cst_10 = arith.constant dense<0.000000e+00> : vector<8xf32>
    %28 = vector.multi_reduction <add>, %27, %cst_10 [1] : vector<8x128xf32> to vector<8xf32>
    %29 = vector.shape_cast %28 : vector<8xf32> to vector<8x1xf32>
    %cst_11 = arith.constant 1.280000e+02 : f32
    %30 = vector.broadcast %cst_11 : f32 to vector<8x1xf32>
    %31 = arith.divf %29, %30 : vector<8x1xf32>
    %32 = vector.broadcast %31 : vector<8x1xf32> to vector<8x128xf32>
    %33 = arith.subf %27, %32 : vector<8x128xf32>
    %34 = arith.mulf %33, %33 : vector<8x128xf32>
    %cst_12 = arith.constant dense<0.000000e+00> : vector<8xf32>
    %35 = vector.multi_reduction <add>, %34, %cst_12 [1] : vector<8x128xf32> to vector<8xf32>
    %36 = vector.shape_cast %35 : vector<8xf32> to vector<8x1xf32>
    %cst_13 = arith.constant 1.280000e+02 : f32
    %37 = vector.broadcast %cst_13 : f32 to vector<8x1xf32>
    %38 = arith.divf %36, %37 : vector<8x1xf32>
    %39 = vector.broadcast %31 : vector<8x1xf32> to vector<8x128xf32>
    %40 = arith.subf %27, %39 : vector<8x128xf32>
    %cst_14 = arith.constant 9.99999974E-6 : f32
    %41 = vector.broadcast %cst_14 : f32 to vector<8x1xf32>
    %42 = arith.addf %38, %41 : vector<8x1xf32>
    %43 = math.rsqrt %42 : vector<8x1xf32>
    %44 = vector.broadcast %43 : vector<8x1xf32> to vector<8x128xf32>
    %45 = arith.mulf %40, %44 : vector<8x128xf32>
    %c0_15 = arith.constant 0 : index
    %c0_16 = arith.constant 0 : index
    %46 = vector.load %arg13[%c0_15, %c0_16] : memref<8x128xf32, #tpu.memory_space<vmem>>, vector<8x128xf32>
    %47 = arith.index_cast %arg1 : i32 to index
    %c0_17 = arith.constant 0 : index
    %c0_18 = arith.constant 0 : index
    %48 = vector.load %arg6[%47, %c0_17, %c0_18] : memref<4x128x128xbf16, #tpu.memory_space<vmem>>, vector<1x128x128xbf16>
    %49 = vector.shape_cast %48 : vector<1x128x128xbf16> to vector<128x128xbf16>
    %50 = arith.index_cast %arg1 : i32 to index
    %c0_19 = arith.constant 0 : index
    %c0_20 = arith.constant 0 : index
    %51 = vector.load %arg7[%50, %c0_19, %c0_20] : memref<4x1x128xf32, #tpu.memory_space<vmem>>, vector<1x1x128xf32>
    %52 = vector.shape_cast %51 : vector<1x1x128xf32> to vector<1x128xf32>
    %53 = arith.truncf %46 : vector<8x128xf32> to vector<8x128xbf16>
    %cst_21 = arith.constant dense<0.000000e+00> : vector<8x128xf32>
    %54 = tpu.matmul %53, %49, %cst_21 {dimension_numbers = #tpu.dot_dimension_numbers<[1], [0], [0], [1], [0, 0, 1, 1], [], []>} : vector<8x128xbf16>, vector<128x128xbf16>, vector<8x128xf32> -> vector<8x128xf32>
    %55 = vector.broadcast %52 : vector<1x128xf32> to vector<8x128xf32>
    %56 = arith.addf %54, %55 : vector<8x128xf32>
    %57 = arith.mulf %56, %56 : vector<8x128xf32>
    %58 = arith.mulf %56, %57 : vector<8x128xf32>
    %cst_22 = arith.constant 4.471500e-02 : f32
    %59 = vector.broadcast %cst_22 : f32 to vector<8x128xf32>
    %60 = arith.mulf %59, %58 : vector<8x128xf32>
    %61 = arith.addf %56, %60 : vector<8x128xf32>
    %cst_23 = arith.constant 0.797884583 : f32
    %62 = vector.broadcast %cst_23 : f32 to vector<8x128xf32>
    %63 = arith.mulf %62, %61 : vector<8x128xf32>
    %64 = math.tanh %63 : vector<8x128xf32>
    %cst_24 = arith.constant 1.000000e+00 : f32
    %65 = vector.broadcast %cst_24 : f32 to vector<8x128xf32>
    %66 = arith.addf %65, %64 : vector<8x128xf32>
    %cst_25 = arith.constant 5.000000e-01 : f32
    %67 = vector.broadcast %cst_25 : f32 to vector<8x128xf32>
    %68 = arith.mulf %67, %66 : vector<8x128xf32>
    %69 = arith.mulf %56, %68 : vector<8x128xf32>
    %70 = arith.addf %69, %46 : vector<8x128xf32>
    %cst_26 = arith.constant dense<0.000000e+00> : vector<8xf32>
    %71 = vector.multi_reduction <add>, %70, %cst_26 [1] : vector<8x128xf32> to vector<8xf32>
    %72 = vector.shape_cast %71 : vector<8xf32> to vector<8x1xf32>
    %cst_27 = arith.constant 1.280000e+02 : f32
    %73 = vector.broadcast %cst_27 : f32 to vector<8x1xf32>
    %74 = arith.divf %72, %73 : vector<8x1xf32>
    %75 = vector.broadcast %74 : vector<8x1xf32> to vector<8x128xf32>
    %76 = arith.subf %70, %75 : vector<8x128xf32>
    %77 = arith.mulf %76, %76 : vector<8x128xf32>
    %cst_28 = arith.constant dense<0.000000e+00> : vector<8xf32>
    %78 = vector.multi_reduction <add>, %77, %cst_28 [1] : vector<8x128xf32> to vector<8xf32>
    %79 = vector.shape_cast %78 : vector<8xf32> to vector<8x1xf32>
    %cst_29 = arith.constant 1.280000e+02 : f32
    %80 = vector.broadcast %cst_29 : f32 to vector<8x1xf32>
    %81 = arith.divf %79, %80 : vector<8x1xf32>
    %82 = vector.broadcast %74 : vector<8x1xf32> to vector<8x128xf32>
    %83 = arith.subf %70, %82 : vector<8x128xf32>
    %cst_30 = arith.constant 9.99999974E-6 : f32
    %84 = vector.broadcast %cst_30 : f32 to vector<8x1xf32>
    %85 = arith.addf %81, %84 : vector<8x1xf32>
    %86 = math.rsqrt %85 : vector<8x1xf32>
    %87 = vector.broadcast %86 : vector<8x1xf32> to vector<8x128xf32>
    %88 = arith.mulf %83, %87 : vector<8x128xf32>
    %c0_31 = arith.constant 0 : index
    %c0_32 = arith.constant 0 : index
    %89 = vector.load %arg12[%c0_31, %c0_32] : memref<8x128xf32, #tpu.memory_space<vmem>>, vector<8x128xf32>
    tpu.vector_store %arg12[%c0_31, %c0_32], %45 {strides = array<i32>} : memref<8x128xf32, #tpu.memory_space<vmem>>, vector<8x128xf32>,
    %c0_33 = arith.constant 0 : index
    %c0_34 = arith.constant 0 : index
    %90 = vector.load %arg13[%c0_33, %c0_34] : memref<8x128xf32, #tpu.memory_space<vmem>>, vector<8x128xf32>
    tpu.vector_store %arg13[%c0_33, %c0_34], %88 {strides = array<i32>} : memref<8x128xf32, #tpu.memory_space<vmem>>, vector<8x128xf32>,
    %c1_i32 = arith.constant 1 : i32
    %91 = arith.cmpi sge, %arg1, %c1_i32 : i32
    %92 = arith.extui %91 : i1 to i32
    %c0_i32_35 = arith.constant 0 : i32
    %93 = arith.cmpi ne, %92, %c0_i32_35 : i32
    scf.if %93 {
      %c0_37 = arith.constant 0 : index
      %c0_38 = arith.constant 0 : index
      %97 = vector.load %arg14[%c0_37, %c0_38] : memref<8x128xf32, #tpu.memory_space<vmem>>, vector<8x128xf32>
      %98 = arith.addf %97, %88 : vector<8x128xf32>
      %c0_39 = arith.constant 0 : index
      %c0_40 = arith.constant 0 : index
      %99 = vector.load %arg14[%c0_39, %c0_40] : memref<8x128xf32, #tpu.memory_space<vmem>>, vector<8x128xf32>
      tpu.vector_store %arg14[%c0_39, %c0_40], %98 {strides = array<i32>} : memref<8x128xf32, #tpu.memory_space<vmem>>, vector<8x128xf32>,
    } else {
    }
    %c3_i32 = arith.constant 3 : i32
    %94 = arith.cmpi eq, %arg1, %c3_i32 : i32
    %95 = arith.extui %94 : i1 to i32
    %c0_i32_36 = arith.constant 0 : i32
    %96 = arith.cmpi ne, %95, %c0_i32_36 : i32
    scf.if %96 {
      %97 = arith.truncf %45 : vector<8x128xf32> to vector<8x128xbf16>
      %c0_37 = arith.constant 0 : index
      %c0_38 = arith.constant 0 : index
      %98 = vector.load %arg8[%c0_37, %c0_38] : memref<128x128xbf16, #tpu.memory_space<vmem>>, vector<128x128xbf16>
      %cst_39 = arith.constant dense<0.000000e+00> : vector<8x128xf32>
      %99 = tpu.matmul %97, %98, %cst_39 {dimension_numbers = #tpu.dot_dimension_numbers<[1], [0], [0], [1], [0, 0, 1, 1], [], []>} : vector<8x128xbf16>, vector<128x128xbf16>, vector<8x128xf32> -> vector<8x128xf32>
      %c0_40 = arith.constant 0 : index
      %c0_41 = arith.constant 0 : index
      %100 = vector.load %arg9[%c0_40, %c0_41] : memref<1x128xf32, #tpu.memory_space<vmem>>, vector<1x128xf32>
      %101 = vector.broadcast %100 : vector<1x128xf32> to vector<8x128xf32>
      %102 = arith.addf %99, %101 : vector<8x128xf32>
      %c0_42 = arith.constant 0 : index
      %c0_43 = arith.constant 0 : index
      %103 = vector.load %arg10[%c0_42, %c0_43] : memref<8x128xf32, #tpu.memory_space<vmem>>, vector<8x128xf32>
      tpu.vector_store %arg10[%c0_42, %c0_43], %102 {strides = array<i32>} : memref<8x128xf32, #tpu.memory_space<vmem>>, vector<8x128xf32>,
      %c0_44 = arith.constant 0 : index
      %c0_45 = arith.constant 0 : index
      %104 = vector.load %arg14[%c0_44, %c0_45] : memref<8x128xf32, #tpu.memory_space<vmem>>, vector<8x128xf32>
      %cst_46 = arith.constant dense<0.000000e+00> : vector<8xf32>
      %105 = vector.multi_reduction <add>, %104, %cst_46 [1] : vector<8x128xf32> to vector<8xf32>
      %106 = vector.shape_cast %105 : vector<8xf32> to vector<8x1xf32>
      %cst_47 = arith.constant 1.280000e+02 : f32
      %107 = vector.broadcast %cst_47 : f32 to vector<8x1xf32>
      %108 = arith.divf %106, %107 : vector<8x1xf32>
      %109 = vector.broadcast %108 : vector<8x1xf32> to vector<8x128xf32>
      %110 = arith.subf %104, %109 : vector<8x128xf32>
      %111 = arith.mulf %110, %110 : vector<8x128xf32>
      %cst_48 = arith.constant dense<0.000000e+00> : vector<8xf32>
      %112 = vector.multi_reduction <add>, %111, %cst_48 [1] : vector<8x128xf32> to vector<8xf32>
      %113 = vector.shape_cast %112 : vector<8xf32> to vector<8x1xf32>
      %cst_49 = arith.constant 1.280000e+02 : f32
      %114 = vector.broadcast %cst_49 : f32 to vector<8x1xf32>
      %115 = arith.divf %113, %114 : vector<8x1xf32>
      %116 = vector.broadcast %108 : vector<8x1xf32> to vector<8x128xf32>
      %117 = arith.subf %104, %116 : vector<8x128xf32>
      %cst_50 = arith.constant 9.99999974E-6 : f32
      %118 = vector.broadcast %cst_50 : f32 to vector<8x1xf32>
      %119 = arith.addf %115, %118 : vector<8x1xf32>
      %120 = math.rsqrt %119 : vector<8x1xf32>
      %121 = vector.broadcast %120 : vector<8x1xf32> to vector<8x128xf32>
      %122 = arith.mulf %117, %121 : vector<8x128xf32>
      %c0_51 = arith.constant 0 : index
      %c0_52 = arith.constant 0 : index
      %123 = vector.load %arg11[%c0_51, %c0_52] : memref<8x128xf32, #tpu.memory_space<vmem>>, vector<8x128xf32>
      tpu.vector_store %arg11[%c0_51, %c0_52], %122 {strides = array<i32>} : memref<8x128xf32, #tpu.memory_space<vmem>>, vector<8x128xf32>,
    } else {
    }
    return
  }
  func.func @transform_0(%arg0: i32, %arg1: i32) -> (i32, i32) {
    %c0_i32 = arith.constant 0 : i32
    %c0_i32_0 = arith.constant 0 : i32
    return %arg0, %c0_i32 : i32, i32
  }
  func.func @transform_1(%arg0: i32, %arg1: i32) -> (i32, i32) {
    %c0_i32 = arith.constant 0 : i32
    %c0_i32_0 = arith.constant 0 : i32
    return %arg0, %c0_i32 : i32, i32
  }
  func.func @transform_2(%arg0: i32, %arg1: i32) -> (i32, i32, i32) {
    %c0_i32 = arith.constant 0 : i32
    %c0_i32_0 = arith.constant 0 : i32
    %c0_i32_1 = arith.constant 0 : i32
    %c0_i32_2 = arith.constant 0 : i32
    return %c0_i32, %c0_i32_0, %c0_i32_1 : i32, i32, i32
  }
  func.func @transform_3(%arg0: i32, %arg1: i32) -> (i32, i32, i32) {
    %c0_i32 = arith.constant 0 : i32
    %c0_i32_0 = arith.constant 0 : i32
    %c0_i32_1 = arith.constant 0 : i32
    %c0_i32_2 = arith.constant 0 : i32
    return %c0_i32, %c0_i32_0, %c0_i32_1 : i32, i32, i32
  }
  func.func @transform_4(%arg0: i32, %arg1: i32) -> (i32, i32, i32) {
    %c0_i32 = arith.constant 0 : i32
    %c0_i32_0 = arith.constant 0 : i32
    %c0_i32_1 = arith.constant 0 : i32
    %c0_i32_2 = arith.constant 0 : i32
    return %c0_i32, %c0_i32_0, %c0_i32_1 : i32, i32, i32
  }
  func.func @transform_5(%arg0: i32, %arg1: i32) -> (i32, i32, i32) {
    %c0_i32 = arith.constant 0 : i32
    %c0_i32_0 = arith.constant 0 : i32
    %c0_i32_1 = arith.constant 0 : i32
    %c0_i32_2 = arith.constant 0 : i32
    return %c0_i32, %c0_i32_0, %c0_i32_1 : i32, i32, i32
  }
  func.func @transform_6(%arg0: i32, %arg1: i32) -> (i32, i32) {
    %c0_i32 = arith.constant 0 : i32
    %c0_i32_0 = arith.constant 0 : i32
    %c0_i32_1 = arith.constant 0 : i32
    return %c0_i32, %c0_i32_0 : i32, i32
  }
  func.func @transform_7(%arg0: i32, %arg1: i32) -> (i32, i32) {
    %c0_i32 = arith.constant 0 : i32
    %c0_i32_0 = arith.constant 0 : i32
    %c0_i32_1 = arith.constant 0 : i32
    return %c0_i32, %c0_i32_0 : i32, i32
  }
  func.func @transform_8(%arg0: i32, %arg1: i32) -> (i32, i32) {
    %c0_i32 = arith.constant 0 : i32
    %c0_i32_0 = arith.constant 0 : i32
    return %arg0, %c0_i32 : i32, i32
  }
  func.func @transform_9(%arg0: i32, %arg1: i32) -> (i32, i32) {
    %c0_i32 = arith.constant 0 : i32
    %c0_i32_0 = arith.constant 0 : i32
    return %arg0, %c0_i32 : i32, i32
  }
}

</mosaic_0001>

<llo_original>
// kernel: tpu_custom_call.1
$region0: #{tpu_custom_call.1}
  #allocation0 [shape = 'u32[]', space=smem, size = 0x4, offset = 0x4, fixed_abs, tag = 'smem constant byte address 0x4 - core index']
  #allocation1 [shape = 'u32[144,128]{1,0:T(1,128)}', space=vmem, size = 0x12000, scoped, tag = 'internal scratch']
  #allocation2 [shape = 'f32[8,128]{1,0:T(8,128)}', space=vmem, size = 0x1000, scoped, tag = 'scratch operand']
  #allocation3 [shape = 'f32[8,128]{1,0:T(8,128)}', space=vmem, size = 0x1000, scoped, tag = 'scratch operand']
  #allocation4 [shape = 'f32[8,128]{1,0:T(8,128)}', space=vmem, size = 0x1000, scoped, tag = 'scratch operand']
  %s0 = inlined_call_operand.hbm [shape: f32[8,128], index: 0, kind: input, shape index: {}]
  %s1 = inlined_call_operand.hbm [shape: f32[8,128], index: 1, kind: input, shape index: {}]
  %s2 = inlined_call_operand.hbm [shape: bf16[4,128,128], index: 2, kind: input, shape index: {}]
  %s3 = inlined_call_operand.vmem [shape: f32[4,1,128], index: 3, kind: input, shape index: {}]
  %s4 = inlined_call_operand.hbm [shape: bf16[4,128,128], index: 4, kind: input, shape index: {}]
  %s5 = inlined_call_operand.vmem [shape: f32[4,1,128], index: 5, kind: input, shape index: {}]
  %s6 = inlined_call_operand.hbm [shape: bf16[128,128], index: 6, kind: input, shape index: {}]
  %s7 = inlined_call_operand.vmem [shape: f32[1,128], index: 7, kind: input, shape index: {}]
  %s8 = inlined_call_operand.hbm [shape: f32[8,128], index: 8, kind: output, shape index: {0}]
  %s9 = inlined_call_operand.hbm [shape: f32[8,128], index: 9, kind: output, shape index: {1}]
  %10 = xla_tuple %s8, %s9
  %s11 = sld [smem:[#allocation0]]
  $region105: #{tpu_custom_call.1} parent=0
    _
  %s13 = ssub.s32 1, %s11
  %s14 = scalar_select 0, %s13, %s11
  $region1: #{tpu_custom_call.1} parent=0
    #allocation5 [shape = 'u8[4096]{0}', space=vmem, size = 0x1000, scoped, tag = 'input window, operand 0, single buffered']
    #allocation6 [shape = 's32[2]{0}', space=sflag, size = 0x8, scoped, tag = 'scoped memory for tpu_custom_call.1']
    #allocation7 [shape = 's32[2]{0}', space=sflag, size = 0x8, scoped, tag = 'scoped memory for tpu_custom_call.1']
    #allocation8 [shape = 'u8[4096]{0}', space=vmem, size = 0x1000, scoped, tag = 'input window, operand 1, single buffered']
    #allocation9 [shape = 's32[1]{0}', space=sflag, size = 0x4, scoped, tag = 'scoped memory for tpu_custom_call.1']
    #allocation10 [shape = 'u8[131072]{0}', space=vmem, size = 0x20000, scoped, tag = 'input window, operand 2, single buffered']
    #allocation11 [shape = 'u8[131072]{0}', space=vmem, size = 0x20000, scoped, tag = 'input window, operand 4, single buffered']
    #allocation12 [shape = 's32[1]{0}', space=sflag, size = 0x4, scoped, tag = 'scoped memory for tpu_custom_call.1']
    #allocation13 [shape = 'u8[32768]{0}', space=vmem, size = 0x8000, scoped, tag = 'input window, operand 6, single buffered']
    #allocation14 [shape = 'u8[4096]{0}', space=vmem, size = 0x1000, scoped, tag = 'output window, operand 0, single buffered']
    #allocation15 [shape = 'u8[4096]{0}', space=vmem, size = 0x1000, scoped, tag = 'output window, operand 1, single buffered']
    #allocation16 [shape = 's32[1]{0}', space=sflag, size = 0x4, scoped, tag = 'scoped memory for tpu_custom_call.1']
    %15 = vsyncpa [#allocation6], 0
    %16 = vsyncpa [#allocation9], 0
    %17 = vsyncpa [#allocation12], 0
    %18 = vsyncpa [#allocation7], 0
    %19 = vsyncpa [#allocation16], 0
    loop: start=0, step=1, limit=6
    $region2: #{tpu_custom_call.1} parent=1 // loop_pre_header
      _
    $region3: #{tpu_custom_call.1} parent=1 // loop_header
      %s21 = sphi 0, %s25
      %p22 = scmp.ge.s32.totalorder %s21, 6
      %s28 = sphi 0, %s40
      %s29 = sphi 0, %s36
      %s30 = sphi 0, %s28
      %s31 = sphi 0, %s29
      %s32 = sphi 0, %s30
      %s33 = sphi 0, %s31
      %s43 = sphi 0, %s45
      %s46 = sphi 0, %s43
      %s47 = sphi 0, %s46
      %s63 = sphi 0, %s47
      %s69 = sphi 0, %s71
      %s72 = sphi 0, %s69
      %s73 = sphi 0, %s72
      %s89 = sphi 0, %s73
      %s93 = sphi 0, %s93
      %s95 = sphi 0, %s93
      %s96 = sphi 0, %s95
      %s110 = sphi 0, %s96
      %s114 = sphi 0, %s114
      %s116 = sphi 0, %s114
      %s117 = sphi 0, %s116
      %s131 = sphi 0, %s117
      %s135 = sphi 0, %s135
      %s137 = sphi 0, %s135
      %s138 = sphi 0, %s137
      %s152 = sphi 0, %s138
      %s156 = sphi 0, %s156
      %s158 = sphi 0, %s156
      %s159 = sphi 0, %s158
      %s173 = sphi 0, %s159
      %s177 = sphi 0, %s177
      %s179 = sphi 0, %s177
      %s180 = sphi 0, %s179
      %s194 = sphi 0, %s180
      %s198 = sphi 0, %s198
      %s200 = sphi 0, %s198
      %s201 = sphi 0, %s200
      %s215 = sphi 0, %s201
      %s221 = sphi 0, %s223
      %s224 = sphi 0, %s221
      %s225 = sphi 0, %s224
      %s241 = sphi 0, %s225
      %s247 = sphi 0, %s249
      %s250 = sphi 0, %s247
      %s251 = sphi 0, %s250
      %s267 = sphi 0, %s251
    $region4: #{tpu_custom_call.1} parent=1 // loop_header_branch
      %24 = sbr.rel (%p22) target = $region8
    $region5: #{tpu_custom_call.1} parent=1 // loop_body
      %s26 = ssub.s32 %s21, 1
      %s27 = ssub.s32 %s21, 2
      %s34 = sadd.s32 1, %s29
      %p35 = scmp.ge.s32.totalorder %s34, 4
      %s36 = scalar_select %p35, 0, %s34
      %s37 = sadd.s32 1, %s28
      %s38 = scalar_select %p35, %s37, %s28
      %p39 = scmp.ge.s32.totalorder %s38, 1
      %s40 = scalar_select %p39, 0, %s38
      %s41 = ssub.s32 %s28, %s40
      %p42 = scmp.eq.s32.totalorder %s41, 0
      %s44 = sadd.s32 %s43, 1
      %s45 = scalar_select %p42, %s43, %s44
      %p48 = pneg %p42
      %p49 = scmp.eq.s32.totalorder %s21, 3
      %p50 = por %p48, %p49
      %p51 = scmp.ne.s32.totalorder %s43, %s46
      %p52 = scmp.eq.s32.totalorder %s21, 0
      %p53 = por %p51, %p52
      %p54 = scmp.ne.s32.totalorder %s43, %s46
      %p55 = scmp.eq.s32.totalorder %s26, 3
      %p56 = por %p54, %p55
      %p57 = scmp.ne.s32.totalorder %s46, %s47
      %p58 = scmp.eq.s32.totalorder %s26, 0
      %p59 = por %p57, %p58
      %p60 = scmp.ne.s32.totalorder %s46, %s47
      %p61 = scmp.eq.s32.totalorder %s27, 3
      %p62 = por %p60, %p61
      %p64 = scmp.ne.s32.totalorder %s47, %s63
      %p65 = scmp.eq.s32.totalorder %s27, 0
      %p66 = por %p64, %p65
      %s67 = ssub.s32 %s28, %s40
      %p68 = scmp.eq.s32.totalorder %s67, 0
      %s70 = sadd.s32 %s69, 1
      %s71 = scalar_select %p68, %s69, %s70
      %p74 = pneg %p68
      %p75 = scmp.eq.s32.totalorder %s21, 3
      %p76 = por %p74, %p75
      %p77 = scmp.ne.s32.totalorder %s69, %s72
      %p78 = scmp.eq.s32.totalorder %s21, 0
      %p79 = por %p77, %p78
      %p80 = scmp.ne.s32.totalorder %s69, %s72
      %p81 = scmp.eq.s32.totalorder %s26, 3
      %p82 = por %p80, %p81
      %p83 = scmp.ne.s32.totalorder %s72, %s73
      %p84 = scmp.eq.s32.totalorder %s26, 0
      %p85 = por %p83, %p84
      %p86 = scmp.ne.s32.totalorder %s72, %s73
      %p87 = scmp.eq.s32.totalorder %s27, 3
      %p88 = por %p86, %p87
      %p90 = scmp.ne.s32.totalorder %s73, %s89
      %p91 = scmp.eq.s32.totalorder %s27, 0
      %p92 = por %p90, %p91
      %s94 = sadd.s32 %s93, 1
      %p97 = scmp.eq.s32.totalorder %s21, 3
      %p98 = scmp.ne.s32.totalorder %s93, %s95
      %p99 = scmp.eq.s32.totalorder %s21, 0
      %p100 = por %p98, %p99
      %p101 = scmp.ne.s32.totalorder %s93, %s95
      %p102 = scmp.eq.s32.totalorder %s26, 3
      %p103 = por %p101, %p102
      %p104 = scmp.ne.s32.totalorder %s95, %s96
      %p105 = scmp.eq.s32.totalorder %s26, 0
      %p106 = por %p104, %p105
      %p107 = scmp.ne.s32.totalorder %s95, %s96
      %p108 = scmp.eq.s32.totalorder %s27, 3
      %p109 = por %p107, %p108
      %p111 = scmp.ne.s32.totalorder %s96, %s110
      %p112 = scmp.eq.s32.totalorder %s27, 0
      %p113 = por %p111, %p112
      %s115 = sadd.s32 %s114, 1
      %p118 = scmp.eq.s32.totalorder %s21, 3
      %p119 = scmp.ne.s32.totalorder %s114, %s116
      %p120 = scmp.eq.s32.totalorder %s21, 0
      %p121 = por %p119, %p120
      %p122 = scmp.ne.s32.totalorder %s114, %s116
      %p123 = scmp.eq.s32.totalorder %s26, 3
      %p124 = por %p122, %p123
      %p125 = scmp.ne.s32.totalorder %s116, %s117
      %p126 = scmp.eq.s32.totalorder %s26, 0
      %p127 = por %p125, %p126
      %p128 = scmp.ne.s32.totalorder %s116, %s117
      %p129 = scmp.eq.s32.totalorder %s27, 3
      %p130 = por %p128, %p129
      %p132 = scmp.ne.s32.totalorder %s117, %s131
      %p133 = scmp.eq.s32.totalorder %s27, 0
      %p134 = por %p132, %p133
      %s136 = sadd.s32 %s135, 1
      %p139 = scmp.eq.s32.totalorder %s21, 3
      %p140 = scmp.ne.s32.totalorder %s135, %s137
      %p141 = scmp.eq.s32.totalorder %s21, 0
      %p142 = por %p140, %p141
      %p143 = scmp.ne.s32.totalorder %s135, %s137
      %p144 = scmp.eq.s32.totalorder %s26, 3
      %p145 = por %p143, %p144
      %p146 = scmp.ne.s32.totalorder %s137, %s138
      %p147 = scmp.eq.s32.totalorder %s26, 0
      %p148 = por %p146, %p147
      %p149 = scmp.ne.s32.totalorder %s137, %s138
      %p150 = scmp.eq.s32.totalorder %s27, 3
      %p151 = por %p149, %p150
      %p153 = scmp.ne.s32.totalorder %s138, %s152
      %p154 = scmp.eq.s32.totalorder %s27, 0
      %p155 = por %p153, %p154
      %s157 = sadd.s32 %s156, 1
      %p160 = scmp.eq.s32.totalorder %s21, 3
      %p161 = scmp.ne.s32.totalorder %s156, %s158
      %p162 = scmp.eq.s32.totalorder %s21, 0
      %p163 = por %p161, %p162
      %p164 = scmp.ne.s32.totalorder %s156, %s158
      %p165 = scmp.eq.s32.totalorder %s26, 3
      %p166 = por %p164, %p165
      %p167 = scmp.ne.s32.totalorder %s158, %s159
      %p168 = scmp.eq.s32.totalorder %s26, 0
      %p169 = por %p167, %p168
      %p170 = scmp.ne.s32.totalorder %s158, %s159
      %p171 = scmp.eq.s32.totalorder %s27, 3
      %p172 = por %p170, %p171
      %p174 = scmp.ne.s32.totalorder %s159, %s173
      %p175 = scmp.eq.s32.totalorder %s27, 0
      %p176 = por %p174, %p175
      %s178 = sadd.s32 %s177, 1
      %p181 = scmp.eq.s32.totalorder %s21, 3
      %p182 = scmp.ne.s32.totalorder %s177, %s179
      %p183 = scmp.eq.s32.totalorder %s21, 0
      %p184 = por %p182, %p183
      %p185 = scmp.ne.s32.totalorder %s177, %s179
      %p186 = scmp.eq.s32.totalorder %s26, 3
      %p187 = por %p185, %p186
      %p188 = scmp.ne.s32.totalorder %s179, %s180
      %p189 = scmp.eq.s32.totalorder %s26, 0
      %p190 = por %p188, %p189
      %p191 = scmp.ne.s32.totalorder %s179, %s180
      %p192 = scmp.eq.s32.totalorder %s27, 3
      %p193 = por %p191, %p192
      %p195 = scmp.ne.s32.totalorder %s180, %s194
      %p196 = scmp.eq.s32.totalorder %s27, 0
      %p197 = por %p195, %p196
      %s199 = sadd.s32 %s198, 1
      %p202 = scmp.eq.s32.totalorder %s21, 3
      %p203 = scmp.ne.s32.totalorder %s198, %s200
      %p204 = scmp.eq.s32.totalorder %s21, 0
      %p205 = por %p203, %p204
      %p206 = scmp.ne.s32.totalorder %s198, %s200
      %p207 = scmp.eq.s32.totalorder %s26, 3
      %p208 = por %p206, %p207
      %p209 = scmp.ne.s32.totalorder %s200, %s201
      %p210 = scmp.eq.s32.totalorder %s26, 0
      %p211 = por %p209, %p210
      %p212 = scmp.ne.s32.totalorder %s200, %s201
      %p213 = scmp.eq.s32.totalorder %s27, 3
      %p214 = por %p212, %p213
      %p216 = scmp.ne.s32.totalorder %s201, %s215
      %p217 = scmp.eq.s32.totalorder %s27, 0
      %p218 = por %p216, %p217
      %s219 = ssub.s32 %s28, %s40
      %p220 = scmp.eq.s32.totalorder %s219, 0
      %s222 = sadd.s32 %s221, 1
      %s223 = scalar_select %p220, %s221, %s222
      %p226 = pneg %p220
      %p227 = scmp.eq.s32.totalorder %s21, 3
      %p228 = por %p226, %p227
      %p229 = scmp.ne.s32.totalorder %s221, %s224
      %p230 = scmp.eq.s32.totalorder %s21, 0
      %p231 = por %p229, %p230
      %p232 = scmp.ne.s32.totalorder %s221, %s224
      %p233 = scmp.eq.s32.totalorder %s26, 3
      %p234 = por %p232, %p233
      %p235 = scmp.ne.s32.totalorder %s224, %s225
      %p236 = scmp.eq.s32.totalorder %s26, 0
      %p237 = por %p235, %p236
      %p238 = scmp.ne.s32.totalorder %s224, %s225
      %p239 = scmp.eq.s32.totalorder %s27, 3
      %p240 = por %p238, %p239
      %p242 = scmp.ne.s32.totalorder %s225, %s241
      %p243 = scmp.eq.s32.totalorder %s27, 0
      %p244 = por %p242, %p243
      %s245 = ssub.s32 %s28, %s40
      %p246 = scmp.eq.s32.totalorder %s245, 0
      %s248 = sadd.s32 %s247, 1
      %s249 = scalar_select %p246, %s247, %s248
      %p252 = pneg %p246
      %p253 = scmp.eq.s32.totalorder %s21, 3
      %p254 = por %p252, %p253
      %p255 = scmp.ne.s32.totalorder %s247, %s250
      %p256 = scmp.eq.s32.totalorder %s21, 0
      %p257 = por %p255, %p256
      %p258 = scmp.ne.s32.totalorder %s247, %s250
      %p259 = scmp.eq.s32.totalorder %s26, 3
      %p260 = por %p258, %p259
      %p261 = scmp.ne.s32.totalorder %s250, %s251
      %p262 = scmp.eq.s32.totalorder %s26, 0
      %p263 = por %p261, %p262
      %p264 = scmp.ne.s32.totalorder %s250, %s251
      %p265 = scmp.eq.s32.totalorder %s27, 3
      %p266 = por %p264, %p265
      %p268 = scmp.ne.s32.totalorder %s251, %s267
      %p269 = scmp.eq.s32.totalorder %s27, 0
      %p270 = por %p268, %p269
      %p271 = scmp.le.s32.totalorder 1, %s21
      %p272 = scmp.lt.s32.totalorder %s21, 5
      %p273 = pnand %p271, %p272
      %p274 = pneg %p273
      // Predicated region
      $region9: #{tpu_custom_call.1} parent=5 // pred_check
        _
      $region10: #{tpu_custom_call.1} parent=5 // pred_check_branch
        %276 = sbr.rel (%p273) target = $region12
      $region11: #{tpu_custom_call.1} parent=5 // pred_region
        %s277 = ssub.s32 %s21, 1
        // Predicated region
        $region13: #{tpu_custom_call.1} parent=11 // pred_check
          %p278 = pneg %p59
        $region14: #{tpu_custom_call.1} parent=11 // pred_check_branch
          %280 = sbr.rel (%p278) target = $region16
        $region15: #{tpu_custom_call.1} parent=11 // pred_region
          %s282 = ssub.s32 128, 128
          %283 = vsyncadd [#allocation6], %s282
          %s284 = smul.addr %s30, 128
          %s285 = scalar_lea.hbm %s0, %s284
          %s287 = sshll.u32 [#allocation5], 4
          %s288 = int_to_ptr.vmem [resolvable:$true] %s287
          %290 = dma.hbm_to_vmem [thread:$0]  %s285, 128, %s288, [#allocation6]
        $region16: #{tpu_custom_call.1} parent=11 // pred_fallthru
          _
        // Predicated region
        $region17: #{tpu_custom_call.1} parent=11 // pred_check
          %p291 = pneg %p85
        $region18: #{tpu_custom_call.1} parent=11 // pred_check_branch
          %293 = sbr.rel (%p291) target = $region20
        $region19: #{tpu_custom_call.1} parent=11 // pred_region
          %s295 = ssub.s32 128, 128
          %296 = vsyncadd [#allocation9], %s295
          %s297 = smul.addr %s30, 128
          %s298 = scalar_lea.hbm %s1, %s297
          %s300 = sshll.u32 [#allocation8], 4
          %s301 = int_to_ptr.vmem [resolvable:$true] %s300
          %303 = dma.hbm_to_vmem [thread:$0]  %s298, 128, %s301, [#allocation9]
        $region20: #{tpu_custom_call.1} parent=11 // pred_fallthru
          _
        // Predicated region
        $region21: #{tpu_custom_call.1} parent=11 // pred_check
          %p304 = pneg %p106
        $region22: #{tpu_custom_call.1} parent=11 // pred_check_branch
          %306 = sbr.rel (%p304) target = $region24
        $region23: #{tpu_custom_call.1} parent=11 // pred_region
          %s308 = ssub.s32 4096, 4096
          %309 = vsyncadd [#allocation9], %s308
          %s310 = sshll.u32 [#allocation10], 4
          %s311 = int_to_ptr.vmem [resolvable:$true] %s310
          %316 = dma.hbm_to_vmem [thread:$0]  %s2, 4096, %s311, [#allocation9], 64, 64, 4
        $region24: #{tpu_custom_call.1} parent=11 // pred_fallthru
          _
        // Predicated region
        $region25: #{tpu_custom_call.1} parent=11 // pred_check
          %p317 = pneg %p127
        $region26: #{tpu_custom_call.1} parent=11 // pred_check_branch
          %319 = sbr.rel (%p317) target = $region28
        $region27: #{tpu_custom_call.1} parent=11 // pred_region
          _
        $region28: #{tpu_custom_call.1} parent=11 // pred_fallthru
          _
        // Predicated region
        $region29: #{tpu_custom_call.1} parent=11 // pred_check
          %p320 = pneg %p148
        $region30: #{tpu_custom_call.1} parent=11 // pred_check_branch
          %322 = sbr.rel (%p320) target = $region32
        $region31: #{tpu_custom_call.1} parent=11 // pred_region
          %s324 = ssub.s32 4096, 4096
          %325 = vsyncadd [#allocation12], %s324
          %s326 = sshll.u32 [#allocation11], 4
          %s327 = int_to_ptr.vmem [resolvable:$true] %s326
          %332 = dma.hbm_to_vmem [thread:$0]  %s4, 4096, %s327, [#allocation12], 64, 64, 4
        $region32: #{tpu_custom_call.1} parent=11 // pred_fallthru
          _
        // Predicated region
        $region33: #{tpu_custom_call.1} parent=11 // pred_check
          %p333 = pneg %p169
        $region34: #{tpu_custom_call.1} parent=11 // pred_check_branch
          %335 = sbr.rel (%p333) target = $region36
        $region35: #{tpu_custom_call.1} parent=11 // pred_region
          _
        $region36: #{tpu_custom_call.1} parent=11 // pred_fallthru
          _
        // Predicated region
        $region37: #{tpu_custom_call.1} parent=11 // pred_check
          %p336 = pneg %p190
        $region38: #{tpu_custom_call.1} parent=11 // pred_check_branch
          %338 = sbr.rel (%p336) target = $region40
        $region39: #{tpu_custom_call.1} parent=11 // pred_region
          %s340 = ssub.s32 1024, 1024
          %341 = vsyncadd [#allocation12], %s340
          %s342 = sshll.u32 [#allocation13], 4
          %s343 = int_to_ptr.vmem [resolvable:$true] %s342
          %348 = dma.hbm_to_vmem [thread:$0]  %s6, 1024, %s343, [#allocation12], 64, 64, 4
        $region40: #{tpu_custom_call.1} parent=11 // pred_fallthru
          _
        // Predicated region
        $region41: #{tpu_custom_call.1} parent=11 // pred_check
          %p349 = pneg %p211
        $region42: #{tpu_custom_call.1} parent=11 // pred_check_branch
          %351 = sbr.rel (%p349) target = $region44
        $region43: #{tpu_custom_call.1} parent=11 // pred_region
          _
        $region44: #{tpu_custom_call.1} parent=11 // pred_fallthru
          _
      $region12: #{tpu_custom_call.1} parent=5 // pred_fallthru
        _
      %p352 = scmp.lt.s32.totalorder %s21, 4
      // Predicated region
      $region45: #{tpu_custom_call.1} parent=5 // pred_check
        %p353 = pneg %p352
      $region46: #{tpu_custom_call.1} parent=5 // pred_check_branch
        %355 = sbr.rel (%p353) target = $region48
      $region47: #{tpu_custom_call.1} parent=5 // pred_region
        _
      $region48: #{tpu_custom_call.1} parent=5 // pred_fallthru
        _
      %p356 = scmp.le.s32.totalorder 1, %s21
      %p357 = scmp.lt.s32.totalorder %s21, 5
      %p358 = pnand %p356, %p357
      %p359 = pneg %p358
      // Predicated region
      $region49: #{tpu_custom_call.1} parent=5 // pred_check
        _
      $region50: #{tpu_custom_call.1} parent=5 // pred_check_branch
        %361 = sbr.rel (%p358) target = $region52
      $region51: #{tpu_custom_call.1} parent=5 // pred_region
        %s362 = ssub.s32 %s21, 1
        // Predicated region
        $region53: #{tpu_custom_call.1} parent=51 // pred_check
          %p363 = pneg %p59
        $region54: #{tpu_custom_call.1} parent=51 // pred_check_branch
          %365 = sbr.rel (%p363) target = $region56
        $region55: #{tpu_custom_call.1} parent=51 // pred_region
          %366 = dma.done [#allocation6], 128
        $region56: #{tpu_custom_call.1} parent=51 // pred_fallthru
          _
        // Predicated region
        $region57: #{tpu_custom_call.1} parent=51 // pred_check
          %p367 = pneg %p85
        $region58: #{tpu_custom_call.1} parent=51 // pred_check_branch
          %369 = sbr.rel (%p367) target = $region60
        $region59: #{tpu_custom_call.1} parent=51 // pred_region
          %370 = dma.done [#allocation9], 128
        $region60: #{tpu_custom_call.1} parent=51 // pred_fallthru
          _
        // Predicated region
        $region61: #{tpu_custom_call.1} parent=51 // pred_check
          %p371 = pneg %p106
        $region62: #{tpu_custom_call.1} parent=51 // pred_check_branch
          %373 = sbr.rel (%p371) target = $region64
        $region63: #{tpu_custom_call.1} parent=51 // pred_region
          %374 = dma.done [#allocation9], 4096
        $region64: #{tpu_custom_call.1} parent=51 // pred_fallthru
          _
        // Predicated region
        $region65: #{tpu_custom_call.1} parent=51 // pred_check
          %p375 = pneg %p148
        $region66: #{tpu_custom_call.1} parent=51 // pred_check_branch
          %377 = sbr.rel (%p375) target = $region68
        $region67: #{tpu_custom_call.1} parent=51 // pred_region
          %378 = dma.done [#allocation12], 4096
        $region68: #{tpu_custom_call.1} parent=51 // pred_fallthru
          _
        // Predicated region
        $region69: #{tpu_custom_call.1} parent=51 // pred_check
          %p379 = pneg %p190
        $region70: #{tpu_custom_call.1} parent=51 // pred_check_branch
          %381 = sbr.rel (%p379) target = $region72
        $region71: #{tpu_custom_call.1} parent=51 // pred_region
          %382 = dma.done [#allocation12], 1024
        $region72: #{tpu_custom_call.1} parent=51 // pred_fallthru
          _
        %p383 = pneg %p59
        %p384 = pneg %p56
        %p385 = pneg %p85
        %p386 = pneg %p82
        %p387 = pneg %p106
        %p388 = pneg %p103
        %p389 = pneg %p127
        %p390 = pneg %p124
        %p391 = pneg %p148
        %p392 = pneg %p145
        %p393 = pneg %p169
        %p394 = pneg %p166
        %p395 = pneg %p190
        %p396 = pneg %p187
        %p397 = pneg %p211
        %p398 = pneg %p208
        %p399 = pneg %p237
        %p400 = pneg %p234
        %p401 = pneg %p263
        %p402 = pneg %p260
        %p404 = scmp.eq.s32.totalorder %s31, 0
        // Predicated region
        $region73: #{tpu_custom_call.1} parent=51 // pred_check
          %p405 = pneg %p404
        $region74: #{tpu_custom_call.1} parent=51 // pred_check_branch
          %407 = sbr.rel (%p405) target = $region76
        $region75: #{tpu_custom_call.1} parent=51 // pred_region
          %v408 = vld [vmem:[#allocation5] sm:$0xff]
          %409 = vst [vmem:[#allocation2] sm:$0xff] %v408
          %v410 = vld [vmem:[#allocation8] sm:$0xff]
          %411 = vst [vmem:[#allocation3] sm:$0xff] %v410
          %412 = vst [vmem:[#allocation4] sm:$0xff] 0.0
        $region76: #{tpu_custom_call.1} parent=51 // pred_fallthru
          _
        %v413 = vld [vmem:[#allocation2] sm:$0xff]
        %s414 = smul.u32 %s31, 16
        %s415 = smul.addr %s414, 4
        %s416 = scalar_lea.vmem [#allocation10], %s415
        %v417 = vld [vmem:[%s416] sm:$0xf]
        %v418 = vld [vmem:[%s416 + $0x4] sm:$0xf]
        %v419 = vld [vmem:[%s416 + $0x8] sm:$0xf]
        %v420 = vld [vmem:[%s416 + $0xc] sm:$0xf]
        %v421 = vld [vmem:[%s416 + $0x10] sm:$0xf]
        %v422 = vld [vmem:[%s416 + $0x14] sm:$0xf]
        %v423 = vld [vmem:[%s416 + $0x18] sm:$0xf]
        %v424 = vld [vmem:[%s416 + $0x1c] sm:$0xf]
        %v425 = vld [vmem:[%s416 + $0x20] sm:$0xf]
        %v426 = vld [vmem:[%s416 + $0x24] sm:$0xf]
        %v427 = vld [vmem:[%s416 + $0x28] sm:$0xf]
        %v428 = vld [vmem:[%s416 + $0x2c] sm:$0xf]
        %v429 = vld [vmem:[%s416 + $0x30] sm:$0xf]
        %v430 = vld [vmem:[%s416 + $0x34] sm:$0xf]
        %v431 = vld [vmem:[%s416 + $0x38] sm:$0xf]
        %v432 = vld [vmem:[%s416 + $0x3c] sm:$0xf]
        %s433 = scalar_lea.vmem %s3, %s31
        %v434 = vld [vmem:[%s433] sm:$0x1]
        %v435 = vpack.c.bf16 %v413, %v413
        %v437 = vlaneseq
        %v438 = vshrl.u32 %v437, 7
        %v439 = vsub.s32 0, %v438
        %v440 = vrot.slane %v434, %v439
        %v458 = vunpack.c.l.b16 %v417
        %v459 = vunpack.c.l.b16 %v418
        %v460 = vunpack.c.l.b16 %v419
        %v461 = vunpack.c.l.b16 %v420
        %v462 = vunpack.c.l.b16 %v421
        %v463 = vunpack.c.l.b16 %v422
        %v464 = vunpack.c.l.b16 %v423
        %v465 = vunpack.c.l.b16 %v424
        %v466 = vunpack.c.l.b16 %v425
        %v467 = vunpack.c.l.b16 %v426
        %v468 = vunpack.c.l.b16 %v427
        %v469 = vunpack.c.l.b16 %v428
        %v470 = vunpack.c.l.b16 %v429
        %v471 = vunpack.c.l.b16 %v430
        %v472 = vunpack.c.l.b16 %v431
        %v473 = vunpack.c.l.b16 %v432
        %v474 = vpack.c.b16 %v459, %v458
        %v475 = vpack.c.b16 %v461, %v460
        %v476 = vpack.c.b16 %v463, %v462
        %v477 = vpack.c.b16 %v465, %v464
        %v478 = vpack.c.b16 %v467, %v466
        %v479 = vpack.c.b16 %v469, %v468
        %v480 = vpack.c.b16 %v471, %v470
        %v481 = vpack.c.b16 %v473, %v472
        %490 = vmatprep.subr.bf16.mxu0 0
        %491 = vmatpush1.bf16.msra.mxu0 %v474
        %492 = vmatprep.subr.bf16.mxu0 0
        %493 = vmatpush1.bf16.msra.mxu0 %v475
        %494 = vmatprep.subr.bf16.mxu0 0
        %495 = vmatpush1.bf16.msra.mxu0 %v476
        %496 = vmatprep.subr.bf16.mxu0 0
        %497 = vmatpush1.bf16.msra.mxu0 %v477
        %498 = vmatprep.subr.bf16.mxu0 0
        %499 = vmatpush1.bf16.msra.mxu0 %v478
        %500 = vmatprep.subr.bf16.mxu0 0
        %501 = vmatpush1.bf16.msra.mxu0 %v479
        %502 = vmatprep.subr.bf16.mxu0 0
        %503 = vmatpush1.bf16.msra.mxu0 %v480
        %504 = vmatprep.subr.bf16.mxu0 0
        %505 = vmatpush1.bf16.msra.mxu0 %v481
        %506 = vmatprep.subr.bf16.mxu0 0
        %507 = vmatpush1.bf16.msra.mxu0 0
        %508 = vmatprep.subr.bf16.mxu0 0
        %509 = vmatpush1.bf16.msra.mxu0 0
        %510 = vmatprep.subr.bf16.mxu0 0
        %511 = vmatpush1.bf16.msra.mxu0 0
        %512 = vmatprep.subr.bf16.mxu0 0
        %513 = vmatpush1.bf16.msra.mxu0 0
        %514 = vmatprep.subr.bf16.mxu0 0
        %515 = vmatpush1.bf16.msra.mxu0 0
        %516 = vmatprep.subr.bf16.mxu0 0
        %517 = vmatpush1.bf16.msra.mxu0 0
        %518 = vmatprep.subr.bf16.mxu0 0
        %519 = vmatpush1.bf16.msra.mxu0 0
        %520 = vmatprep.subr.bf16.mxu0 0
        %521 = vmatpush1.bf16.msra.mxu0 0
        %522 = vmatprep.mubr.bf16.mxu0 0
        %523 = vmatmul.mubr.bf16.gmra.mrb[0].mxu0 %v435
        %v524 = vpop.f32.mrb[0].mxu0
        %v525 = vadd.f32 %v440, %v524
        %v526 = vpop.f32.mrb[0].mxu0
        %v527 = vpop.f32.mrb[0].mxu0
        %v528 = vpop.f32.mrb[0].mxu0
        %529 = vdwg.mxu0
        %v530 = vmul.f32 %v525, %v525
        %v531 = vmul.f32 %v525, %v530
        %v532 = vmul.f32 %v531, 0.044715
        %v533 = vadd.f32 %v525, %v532
        %v534 = vmul.f32 %v533, 0.7978846
        %v535 = vtanh.pop %v534
        %v536 = vadd.f32 %v535, 1.0
        %v537 = vmul.f32 %v536, 0.5
        %v538 = vmul.f32 %v525, %v537
        %v539 = vadd.f32 %v538, %v413
        %540 = vadd.xlane.f32.xlu0 %v539
        %v541 = vpop.xlane.xlu0 %540
        %v542 = vrcp.pop 128.0
        %v543 = vmul.f32 %v541, %v542
        %v544 = vsub.f32 %v539, %v543
        %v545 = vmul.f32 %v544, %v544
        %546 = vadd.xlane.f32.xlu0 %v545
        %v547 = vpop.xlane.xlu0 %546
        %v548 = vmul.f32 %v547, %v542
        %v549 = vadd.f32 %v548, 1e-05
        %v550 = vrsqrt.pop %v549
        %v551 = vmul.f32 %v544, %v550
        %v552 = vld [vmem:[#allocation3] sm:$0xff]
        %s553 = smul.addr %s414, 4
        %s554 = scalar_lea.vmem [#allocation11], %s553
        %v555 = vld [vmem:[%s554] sm:$0xf]
        %v556 = vld [vmem:[%s554 + $0x4] sm:$0xf]
        %v557 = vld [vmem:[%s554 + $0x8] sm:$0xf]
        %v558 = vld [vmem:[%s554 + $0xc] sm:$0xf]
        %v559 = vld [vmem:[%s554 + $0x10] sm:$0xf]
        %v560 = vld [vmem:[%s554 + $0x14] sm:$0xf]
        %v561 = vld [vmem:[%s554 + $0x18] sm:$0xf]
        %v562 = vld [vmem:[%s554 + $0x1c] sm:$0xf]
        %v563 = vld [vmem:[%s554 + $0x20] sm:$0xf]
        %v564 = vld [vmem:[%s554 + $0x24] sm:$0xf]
        %v565 = vld [vmem:[%s554 + $0x28] sm:$0xf]
        %v566 = vld [vmem:[%s554 + $0x2c] sm:$0xf]
        %v567 = vld [vmem:[%s554 + $0x30] sm:$0xf]
        %v568 = vld [vmem:[%s554 + $0x34] sm:$0xf]
        %v569 = vld [vmem:[%s554 + $0x38] sm:$0xf]
        %v570 = vld [vmem:[%s554 + $0x3c] sm:$0xf]
        %s571 = scalar_lea.vmem %s5, %s31
        %v572 = vld [vmem:[%s571] sm:$0x1]
        %v573 = vpack.c.bf16 %v552, %v552
        %v575 = vlaneseq
        %v576 = vshrl.u32 %v575, 7
        %v577 = vsub.s32 0, %v576
        %v578 = vrot.slane %v572, %v577
        %v596 = vunpack.c.l.b16 %v555
        %v597 = vunpack.c.l.b16 %v556
        %v598 = vunpack.c.l.b16 %v557
        %v599 = vunpack.c.l.b16 %v558
        %v600 = vunpack.c.l.b16 %v559
        %v601 = vunpack.c.l.b16 %v560
        %v602 = vunpack.c.l.b16 %v561
        %v603 = vunpack.c.l.b16 %v562
        %v604 = vunpack.c.l.b16 %v563
        %v605 = vunpack.c.l.b16 %v564
        %v606 = vunpack.c.l.b16 %v565
        %v607 = vunpack.c.l.b16 %v566
        %v608 = vunpack.c.l.b16 %v567
        %v609 = vunpack.c.l.b16 %v568
        %v610 = vunpack.c.l.b16 %v569
        %v611 = vunpack.c.l.b16 %v570
        %v612 = vpack.c.b16 %v597, %v596
        %v613 = vpack.c.b16 %v599, %v598
        %v614 = vpack.c.b16 %v601, %v600
        %v615 = vpack.c.b16 %v603, %v602
        %v616 = vpack.c.b16 %v605, %v604
        %v617 = vpack.c.b16 %v607, %v606
        %v618 = vpack.c.b16 %v609, %v608
        %v619 = vpack.c.b16 %v611, %v610
        %628 = vmatprep.subr.bf16.mxu0 0
        %629 = vmatpush1.bf16.msra.mxu0 %v612
        %630 = vmatprep.subr.bf16.mxu0 0
        %631 = vmatpush1.bf16.msra.mxu0 %v613
        %632 = vmatprep.subr.bf16.mxu0 0
        %633 = vmatpush1.bf16.msra.mxu0 %v614
        %634 = vmatprep.subr.bf16.mxu0 0
        %635 = vmatpush1.bf16.msra.mxu0 %v615
        %636 = vmatprep.subr.bf16.mxu0 0
        %637 = vmatpush1.bf16.msra.mxu0 %v616
        %638 = vmatprep.subr.bf16.mxu0 0
        %639 = vmatpush1.bf16.msra.mxu0 %v617
        %640 = vmatprep.subr.bf16.mxu0 0
        %641 = vmatpush1.bf16.msra.mxu0 %v618
        %642 = vmatprep.subr.bf16.mxu0 0
        %643 = vmatpush1.bf16.msra.mxu0 %v619
        %644 = vmatprep.subr.bf16.mxu0 0
        %645 = vmatpush1.bf16.msra.mxu0 0
        %646 = vmatprep.subr.bf16.mxu0 0
        %647 = vmatpush1.bf16.msra.mxu0 0
        %648 = vmatprep.subr.bf16.mxu0 0
        %649 = vmatpush1.bf16.msra.mxu0 0
        %650 = vmatprep.subr.bf16.mxu0 0
        %651 = vmatpush1.bf16.msra.mxu0 0
        %652 = vmatprep.subr.bf16.mxu0 0
        %653 = vmatpush1.bf16.msra.mxu0 0
        %654 = vmatprep.subr.bf16.mxu0 0
        %655 = vmatpush1.bf16.msra.mxu0 0
        %656 = vmatprep.subr.bf16.mxu0 0
        %657 = vmatpush1.bf16.msra.mxu0 0
        %658 = vmatprep.subr.bf16.mxu0 0
        %659 = vmatpush1.bf16.msra.mxu0 0
        %660 = vmatprep.mubr.bf16.mxu0 0
        %661 = vmatmul.mubr.bf16.gmra.mrb[0].mxu0 %v573
        %v662 = vpop.f32.mrb[0].mxu0
        %v663 = vadd.f32 %v578, %v662
        %v664 = vpop.f32.mrb[0].mxu0
        %v665 = vpop.f32.mrb[0].mxu0
        %v666 = vpop.f32.mrb[0].mxu0
        %667 = vdwg.mxu0
        %v668 = vmul.f32 %v663, %v663
        %v669 = vmul.f32 %v663, %v668
        %v670 = vmul.f32 %v669, 0.044715
        %v671 = vadd.f32 %v663, %v670
        %v672 = vmul.f32 %v671, 0.7978846
        %v673 = vtanh.pop %v672
        %v674 = vadd.f32 %v673, 1.0
        %v675 = vmul.f32 %v674, 0.5
        %v676 = vmul.f32 %v663, %v675
        %v677 = vadd.f32 %v676, %v552
        %678 = vadd.xlane.f32.xlu0 %v677
        %v679 = vpop.xlane.xlu0 %678
        %v680 = vmul.f32 %v679, %v542
        %v681 = vsub.f32 %v677, %v680
        %v682 = vmul.f32 %v681, %v681
        %683 = vadd.xlane.f32.xlu0 %v682
        %v684 = vpop.xlane.xlu0 %683
        %v685 = vmul.f32 %v684, %v542
        %v686 = vadd.f32 %v685, 1e-05
        %v687 = vrsqrt.pop %v686
        %v688 = vmul.f32 %v681, %v687
        %689 = vst [vmem:[#allocation2] sm:$0xff] %v551
        %690 = vst [vmem:[#allocation3] sm:$0xff] %v688
        %p691 = scmp.ge.s32.totalorder %s31, 1
        // Predicated region
        $region77: #{tpu_custom_call.1} parent=51 // pred_check
          %p692 = pneg %p691
        $region78: #{tpu_custom_call.1} parent=51 // pred_check_branch
          %694 = sbr.rel (%p692) target = $region80
        $region79: #{tpu_custom_call.1} parent=51 // pred_region
          %v695 = vld [vmem:[#allocation4] sm:$0xff]
          %v696 = vadd.f32 %v695, %v688
          %697 = vst [vmem:[#allocation4] sm:$0xff] %v696
        $region80: #{tpu_custom_call.1} parent=51 // pred_fallthru
          _
        %p698 = scmp.eq.s32.totalorder %s31, 3
        // Predicated region
        $region81: #{tpu_custom_call.1} parent=51 // pred_check
          %p699 = pneg %p698
        $region82: #{tpu_custom_call.1} parent=51 // pred_check_branch
          %701 = sbr.rel (%p699) target = $region84
        $region83: #{tpu_custom_call.1} parent=51 // pred_region
          %v702 = vpack.c.bf16 %v551, %v551
          %v703 = vld [vmem:[#allocation13] sm:$0xf]
          %v704 = vld [vmem:[#allocation13 + $0x4] sm:$0xf]
          %v705 = vld [vmem:[#allocation13 + $0x8] sm:$0xf]
          %v706 = vld [vmem:[#allocation13 + $0xc] sm:$0xf]
          %v707 = vld [vmem:[#allocation13 + $0x10] sm:$0xf]
          %v708 = vld [vmem:[#allocation13 + $0x14] sm:$0xf]
          %v709 = vld [vmem:[#allocation13 + $0x18] sm:$0xf]
          %v710 = vld [vmem:[#allocation13 + $0x1c] sm:$0xf]
          %v711 = vld [vmem:[#allocation13 + $0x20] sm:$0xf]
          %v712 = vld [vmem:[#allocation13 + $0x24] sm:$0xf]
          %v713 = vld [vmem:[#allocation13 + $0x28] sm:$0xf]
          %v714 = vld [vmem:[#allocation13 + $0x2c] sm:$0xf]
          %v715 = vld [vmem:[#allocation13 + $0x30] sm:$0xf]
          %v716 = vld [vmem:[#allocation13 + $0x34] sm:$0xf]
          %v717 = vld [vmem:[#allocation13 + $0x38] sm:$0xf]
          %v718 = vld [vmem:[#allocation13 + $0x3c] sm:$0xf]
          %v719 = vld [vmem:[%s7] sm:$0x1]
          %v721 = vlaneseq
          %v722 = vshrl.u32 %v721, 7
          %v723 = vsub.s32 0, %v722
          %v724 = vrot.slane %v719, %v723
          %v742 = vunpack.c.l.b16 %v703
          %v743 = vunpack.c.l.b16 %v704
          %v744 = vunpack.c.l.b16 %v705
          %v745 = vunpack.c.l.b16 %v706
          %v746 = vunpack.c.l.b16 %v707
          %v747 = vunpack.c.l.b16 %v708
          %v748 = vunpack.c.l.b16 %v709
          %v749 = vunpack.c.l.b16 %v710
          %v750 = vunpack.c.l.b16 %v711
          %v751 = vunpack.c.l.b16 %v712
          %v752 = vunpack.c.l.b16 %v713
          %v753 = vunpack.c.l.b16 %v714
          %v754 = vunpack.c.l.b16 %v715
          %v755 = vunpack.c.l.b16 %v716
          %v756 = vunpack.c.l.b16 %v717
          %v757 = vunpack.c.l.b16 %v718
          %v758 = vpack.c.b16 %v743, %v742
          %v759 = vpack.c.b16 %v745, %v744
          %v760 = vpack.c.b16 %v747, %v746
          %v761 = vpack.c.b16 %v749, %v748
          %v762 = vpack.c.b16 %v751, %v750
          %v763 = vpack.c.b16 %v753, %v752
          %v764 = vpack.c.b16 %v755, %v754
          %v765 = vpack.c.b16 %v757, %v756
          %774 = vmatprep.subr.bf16.mxu0 0
          %775 = vmatpush1.bf16.msra.mxu0 %v758
          %776 = vmatprep.subr.bf16.mxu0 0
          %777 = vmatpush1.bf16.msra.mxu0 %v759
          %778 = vmatprep.subr.bf16.mxu0 0
          %779 = vmatpush1.bf16.msra.mxu0 %v760
          %780 = vmatprep.subr.bf16.mxu0 0
          %781 = vmatpush1.bf16.msra.mxu0 %v761
          %782 = vmatprep.subr.bf16.mxu0 0
          %783 = vmatpush1.bf16.msra.mxu0 %v762
          %784 = vmatprep.subr.bf16.mxu0 0
          %785 = vmatpush1.bf16.msra.mxu0 %v763
          %786 = vmatprep.subr.bf16.mxu0 0
          %787 = vmatpush1.bf16.msra.mxu0 %v764
          %788 = vmatprep.subr.bf16.mxu0 0
          %789 = vmatpush1.bf16.msra.mxu0 %v765
          %790 = vmatprep.subr.bf16.mxu0 0
          %791 = vmatpush1.bf16.msra.mxu0 0
          %792 = vmatprep.subr.bf16.mxu0 0
          %793 = vmatpush1.bf16.msra.mxu0 0
          %794 = vmatprep.subr.bf16.mxu0 0
          %795 = vmatpush1.bf16.msra.mxu0 0
          %796 = vmatprep.subr.bf16.mxu0 0
          %797 = vmatpush1.bf16.msra.mxu0 0
          %798 = vmatprep.subr.bf16.mxu0 0
          %799 = vmatpush1.bf16.msra.mxu0 0
          %800 = vmatprep.subr.bf16.mxu0 0
          %801 = vmatpush1.bf16.msra.mxu0 0
          %802 = vmatprep.subr.bf16.mxu0 0
          %803 = vmatpush1.bf16.msra.mxu0 0
          %804 = vmatprep.subr.bf16.mxu0 0
          %805 = vmatpush1.bf16.msra.mxu0 0
          %806 = vmatprep.mubr.bf16.mxu0 0
          %807 = vmatmul.mubr.bf16.gmra.mrb[0].mxu0 %v702
          %v808 = vpop.f32.mrb[0].mxu0
          %v809 = vadd.f32 %v724, %v808
          %v810 = vpop.f32.mrb[0].mxu0
          %v811 = vpop.f32.mrb[0].mxu0
          %v812 = vpop.f32.mrb[0].mxu0
          %813 = vdwg.mxu0
          %814 = vst [vmem:[#allocation14] sm:$0xff] %v809
          %v815 = vld [vmem:[#allocation4] sm:$0xff]
          %816 = vadd.xlane.f32.xlu0 %v815
          %v817 = vpop.xlane.xlu0 %816
          %v818 = vmul.f32 %v817, %v542
          %v819 = vsub.f32 %v815, %v818
          %v820 = vmul.f32 %v819, %v819
          %821 = vadd.xlane.f32.xlu0 %v820
          %v822 = vpop.xlane.xlu0 %821
          %v823 = vmul.f32 %v822, %v542
          %v824 = vadd.f32 %v823, 1e-05
          %v825 = vrsqrt.pop %v824
          %v826 = vmul.f32 %v819, %v825
          %827 = vst [vmem:[#allocation15] sm:$0xff] %v826
        $region84: #{tpu_custom_call.1} parent=51 // pred_fallthru
          _
        // Predicated region
        $region85: #{tpu_custom_call.1} parent=51 // pred_check
          %p828 = pneg %p234
        $region86: #{tpu_custom_call.1} parent=51 // pred_check_branch
          %830 = sbr.rel (%p828) target = $region88
        $region87: #{tpu_custom_call.1} parent=51 // pred_region
          %s832 = ssub.s32 128, 128
          %833 = vsyncadd [#allocation7], %s832
          %s834 = smul.addr %s30, 128
          %s835 = scalar_lea.hbm %s8, %s834
          %s837 = sshll.u32 [#allocation14], 4
          %s838 = int_to_ptr.vmem [resolvable:$true] %s837
          %840 = dma.vmem_to_hbm [thread:$0]  %s838, 128, %s835, [#allocation7]
        $region88: #{tpu_custom_call.1} parent=51 // pred_fallthru
          _
        // Predicated region
        $region89: #{tpu_custom_call.1} parent=51 // pred_check
          %p841 = pneg %p260
        $region90: #{tpu_custom_call.1} parent=51 // pred_check_branch
          %843 = sbr.rel (%p841) target = $region92
        $region91: #{tpu_custom_call.1} parent=51 // pred_region
          %s845 = ssub.s32 128, 128
          %846 = vsyncadd [#allocation16], %s845
          %s847 = smul.addr %s30, 128
          %s848 = scalar_lea.hbm %s9, %s847
          %s850 = sshll.u32 [#allocation15], 4
          %s851 = int_to_ptr.vmem [resolvable:$true] %s850
          %853 = dma.vmem_to_hbm [thread:$0]  %s851, 128, %s848, [#allocation16]
        $region92: #{tpu_custom_call.1} parent=51 // pred_fallthru
          _
        // Predicated region
        $region93: #{tpu_custom_call.1} parent=51 // pred_check
          %p854 = pneg %p234
        $region94: #{tpu_custom_call.1} parent=51 // pred_check_branch
          %856 = sbr.rel (%p854) target = $region96
        $region95: #{tpu_custom_call.1} parent=51 // pred_region
          %857 = dma.done [#allocation7], 128
        $region96: #{tpu_custom_call.1} parent=51 // pred_fallthru
          _
        // Predicated region
        $region97: #{tpu_custom_call.1} parent=51 // pred_check
          %p858 = pneg %p260
        $region98: #{tpu_custom_call.1} parent=51 // pred_check_branch
          %860 = sbr.rel (%p858) target = $region100
        $region99: #{tpu_custom_call.1} parent=51 // pred_region
          %861 = dma.done [#allocation16], 128
        $region100: #{tpu_custom_call.1} parent=51 // pred_fallthru
          _
      $region52: #{tpu_custom_call.1} parent=5 // pred_fallthru
        _
      %p862 = scmp.le.s32.totalorder 2, %s21
      // Predicated region
      $region101: #{tpu_custom_call.1} parent=5 // pred_check
        %p863 = pneg %p862
      $region102: #{tpu_custom_call.1} parent=5 // pred_check_branch
        %865 = sbr.rel (%p863) target = $region104
      $region103: #{tpu_custom_call.1} parent=5 // pred_region
        %s866 = ssub.s32 %s21, 2
      $region104: #{tpu_custom_call.1} parent=5 // pred_fallthru
        _
    $region6: #{tpu_custom_call.1} parent=1 // loop_footer
      %s25 = sadd.s32 1, %s21
    $region7: #{tpu_custom_call.1} parent=1 // loop_footer_branch
      %20 = sbr.rel target = $region3
    $region8: #{tpu_custom_call.1} parent=1 // loop_exit
      _
    %867 = vsyncpa [#allocation6], 1
    %s868 = scalar_lea.sflag [#allocation6], 1
    %869 = vsyncpa %s868, 1
    %870 = vsyncpa [#allocation9], 1
    %871 = vsyncpa [#allocation12], 1
    %872 = vsyncpa [#allocation7], 1
    %s873 = scalar_lea.sflag [#allocation7], 1
    %874 = vsyncpa %s873, 1
    %875 = vsyncpa [#allocation16], 1

</llo_original>
